<compile_context>
chip_gen: v6e
topology: v6e:2x2x1
jax: 0.10.0
libtpu: 0.0.40
codegen_flags: <defaults>
</compile_context>

<pallas_src>
import functools

import jax
import jax.numpy as jnp
from jax import lax
from jax.experimental import pallas as pl
from jax.experimental.pallas import tpu as pltpu

ALPHA = 0.25
GAMMA = 2.0


def _vmem_capacity_bytes():
    """Physical VMEM of the attached TPU (conservative fallback = v7x's 64 MiB per TC)."""
    try:
        return int(pltpu.get_tpu_info().vmem_capacity_bytes)
    except Exception:
        return 64 * 1024 * 1024


def _choose_vmem_limit(capacity):
    # <= ~48 MiB on v7x (64 MiB physical, keep double-buffering headroom);
    # up to 96 MiB on v5e/v6e (128 MiB physical, scoped default is only 16-32 MiB).
    return int(min((3 * capacity) // 4, 96 * 1024 * 1024))


def _choose_tile_n(n, c, itemsize, capacity, vmem_limit):
    """Largest multiple-of-8 row tile whose honest VMEM working set fits comfortably."""
    # Per-row VMEM working set:
    #   2x double-buffered (tile, C) logits input blocks (native dtype)
    # + 2x double-buffered (tile, 1) int32 target blocks, lane-padded to 128 lanes in VMEM
    # + ~3 full-width f32 temporaries the compiler materializes (xm, exp(xm), one-hot select).
    bytes_per_row = 2 * c * itemsize + 2 * 128 * 4 + 3 * c * 4
    budget = max(1, (2 * vmem_limit) // 5)  # ~40% of the scoped limit
    t = budget // bytes_per_row
    # Keep each logits DMA block in the multi-MiB sweet spot (generation-safe cap).
    logits_block_cap = (4 if capacity <= 64 * 1024 * 1024 else 8) * 1024 * 1024
    t = min(t, logits_block_cap // max(1, c * itemsize))
    # Never a single-step grid for non-trivial inputs: keep >=4 pipelined steps
    # (>=8 on 2-TensorCore chips) so prefetch/compute overlap and both cores stay busy.
    if n * c * itemsize > 4 * 1024 * 1024:
        min_steps = 8 if capacity <= 64 * 1024 * 1024 else 4
        t = min(t, -(-n // min_steps))
    t = max(8, (t // 8) * 8)
    return n if n <= t else t


def _focal_partial_kernel(x_ref, t_ref, o_ref, *, n_total):
    # x_ref: (TILE_N, C) logits (native dtype), t_ref: (TILE_N, 1) int32 targets,
    # o_ref: (8, 128) f32 block holding this tile's partial CE sum at [0, 0].
    i = pl.program_id(0)
    x = x_ref[...]                                     # (T, C) native dtype (bf16 stays packed)
    tn, c = x.shape

    # Row max and one-hot target gather in the native dtype.
    # Both are exact (max; select-of-one-nonzero summed against zeros), and on bf16 inputs
    # they cost half the vector-ALU slots / vreg footprint of an f32 pass.
    m = jnp.max(x, axis=-1, keepdims=True)             # (T, 1) native
    tgt = t_ref[...]                                   # (T, 1) int32
    col = lax.broadcasted_iota(jnp.int32, (1, c), 1)   # (1, C); broadcasts in the compare
    tgt_x = jnp.sum(jnp.where(col == tgt, x, 0.0), axis=-1, keepdims=True)  # (T, 1) native

    # f32 only where numerics require it: shifted exp, its sum, and the log.
    m_f = m.astype(jnp.float32)                        # (T, 1)
    xm = x.astype(jnp.float32) - m_f                   # (T, C) f32
    sum_exp = jnp.sum(jnp.exp(xm), axis=-1, keepdims=True)        # (T, 1) f32
    ce_per = jnp.log(sum_exp) - (tgt_x.astype(jnp.float32) - m_f)  # (T, 1) per-sample CE

    # Mask padded rows of the ragged last tile (trace-time: emitted only when ragged).
    # Keep this as a select (not a multiply) so garbage Inf/NaN in padded rows cannot leak.
    if n_total % tn != 0:
        row = lax.broadcasted_iota(jnp.int32, (tn, 1), 0)
        valid = (i * tn + row) < n_total
        ce_per = jnp.where(valid, ce_per, 0.0)

    partial = jnp.sum(ce_per)                          # scalar f32

    # Single lane-dense (8, 128) store: partial at [0, 0], zeros elsewhere.
    r8 = lax.broadcasted_iota(jnp.int32, (8, 128), 0)
    c128 = lax.broadcasted_iota(jnp.int32, (8, 128), 1)
    o_ref[...] = jnp.where((r8 == 0) & (c128 == 0), partial, 0.0)


def focal_loss(inputs, targets, *, alpha=ALPHA, gamma=GAMMA, tile_n=None):
    """inputs: [N, C] float logits (f32 or bf16); targets: [N] int class ids. Returns f32 scalar."""
    n, c = inputs.shape
    itemsize = inputs.dtype.itemsize
    capacity = _vmem_capacity_bytes()
    vmem_limit = _choose_vmem_limit(capacity)
    if tile_n is None:
        tile_n = _choose_tile_n(n, c, itemsize, capacity, vmem_limit)
    if tile_n < n:
        assert tile_n % 8 == 0, f"tile_n={tile_n} must be a multiple of 8 when tiling N={n}"
    num_tiles = pl.cdiv(n, tile_n)
    t2d = targets.astype(jnp.int32).reshape(n, 1)

    cost = pl.CostEstimate(
        flops=5 * n * c,                               # max, sub, sum-exp, select, sum
        transcendentals=n * c,                         # exp per element (+ log per row)
        bytes_accessed=n * c * itemsize + 4 * n + num_tiles * 8 * 128 * 4,
    )

    partials = pl.pallas_call(
        functools.partial(_focal_partial_kernel, n_total=n),
        out_shape=jax.ShapeDtypeStruct((num_tiles * 8, 128), jnp.float32),
        grid=(num_tiles,),
        in_specs=[
            pl.BlockSpec((tile_n, c), lambda i: (i, 0)),
            pl.BlockSpec((tile_n, 1), lambda i: (i, 0)),
        ],
        out_specs=pl.BlockSpec((8, 128), lambda i: (i, 0)),
        compiler_params=pltpu.CompilerParams(
            dimension_semantics=("parallel",),         # independent tiles -> megacore on v7x
            vmem_limit_bytes=vmem_limit,
        ),
        cost_estimate=cost,
    )(inputs, t2d)

    # Tiny scalar epilogue — exactly the PyTorch module's math on the mean CE.
    ce = jnp.sum(partials) / jnp.float32(n)
    pt = jnp.exp(-ce)
    one_minus_pt = 1.0 - pt
    if float(gamma).is_integer():
        mod = lax.integer_pow(one_minus_pt, int(gamma))  # gamma=2 -> d*d, NaN-safe
    else:
        mod = one_minus_pt ** jnp.float32(gamma)
    return jnp.float32(alpha) * mod * ce


def _reference(inputs, targets, alpha=ALPHA, gamma=GAMMA):
    # Pure-JAX reference of the PyTorch forward for sanity checking.
    x = inputs.astype(jnp.float32)
    lse = jax.nn.logsumexp(x, axis=-1)
    tgt_logit = jnp.take_along_axis(x, targets[:, None].astype(jnp.int32), axis=-1)[:, 0]
    ce = jnp.mean(lse - tgt_logit)
    pt = jnp.exp(-ce)
    return alpha * (1.0 - pt) ** gamma * ce


if __name__ == "__main__":
    key = jax.random.PRNGKey(0)
    k1, k2, k3, k4 = jax.random.split(key, 4)

    # Case 1: small f32 case (single tile), matches the module's toy shapes.
    N1, C1 = 8, 32
    x1 = jax.random.normal(k1, (N1, C1), dtype=jnp.float32)
    t1 = jax.random.randint(k2, (N1,), 0, C1, dtype=jnp.int32)
    out1 = jax.block_until_ready(focal_loss(x1, t1))
    ref1 = _reference(x1, t1)
    assert jnp.allclose(out1, ref1, rtol=1e-5, atol=1e-5), (out1, ref1)

    # Case 2: bf16 logits, multiple tiles + ragged last tile
    # (exercises masking, native-dtype max/gather and the parallel grid).
    N2, C2 = 200, 128
    x2 = jax.random.normal(k3, (N2, C2), dtype=jnp.float32).astype(jnp.bfloat16)
    t2 = jax.random.randint(k4, (N2,), 0, C2, dtype=jnp.int32)
    out2 = jax.block_until_ready(focal_loss(x2, t2, tile_n=64))
    ref2 = _reference(x2, t2)
    assert jnp.allclose(out2, ref2, rtol=1e-4, atol=1e-4), (out2, ref2)

    # Case 3: auto tile sizing path with a non-multiple-of-8 batch (ragged tail, f32).
    N3, C3 = 100, 32
    x3 = jax.random.normal(k1, (N3, C3), dtype=jnp.float32)
    t3 = jax.random.randint(k2, (N3,), 0, C3, dtype=jnp.int32)
    out3 = jax.block_until_ready(focal_loss(x3, t3))
    ref3 = _reference(x3, t3)
    assert jnp.allclose(out3, ref3, rtol=1e-5, atol=1e-5), (out3, ref3)

    print("KERNEL_OK")
</pallas_src>

<mosaic_0001>
module attributes {stable_mosaic.version = 11 : i64} {
  func.func @_focal_partial_kernel(%arg0: i32, %arg1: memref<8x32xf32, #tpu.memory_space<vmem>>, %arg2: memref<8x1xi32, #tpu.memory_space<vmem>>, %arg3: memref<8x128xf32, #tpu.memory_space<vmem>>) attributes {dimension_semantics = [#tpu.dimension_semantics<parallel>], iteration_bounds = array<i64: 1>, scalar_prefetch = 0 : i64, scratch_operands = 0 : i64, tpu.core_type = #tpu.core_type<tc>, window_params = [{transform_indices = @transform_0, window_bounds = array<i64: 8, 32>}, {transform_indices = @transform_1, window_bounds = array<i64: 8, 1>}, {transform_indices = @transform_2, window_bounds = array<i64: 8, 128>}]} {
    %c0 = arith.constant 0 : index
    %c0_0 = arith.constant 0 : index
    %0 = vector.load %arg1[%c0, %c0_0] : memref<8x32xf32, #tpu.memory_space<vmem>>, vector<8x32xf32>
    %cst = arith.constant dense<0xFF800000> : vector<8xf32>
    %1 = vector.multi_reduction <maximumf>, %0, %cst [1] : vector<8x32xf32> to vector<8xf32>
    %2 = vector.shape_cast %1 : vector<8xf32> to vector<8x1xf32>
    %c0_1 = arith.constant 0 : index
    %c0_2 = arith.constant 0 : index
    %3 = vector.load %arg2[%c0_1, %c0_2] : memref<8x1xi32, #tpu.memory_space<vmem>>, vector<8x1xi32>
    %4 = tpu.iota {dimensions = array<i32: 1>} : vector<1x32xi32>
    %5 = vector.broadcast %4 : vector<1x32xi32> to vector<8x32xi32>
    %6 = vector.broadcast %3 : vector<8x1xi32> to vector<8x32xi32>
    %7 = arith.cmpi eq, %5, %6 : vector<8x32xi32>
    %cst_3 = arith.constant 0.000000e+00 : f32
    %8 = vector.broadcast %cst_3 : f32 to vector<8x32xf32>
    %9 = arith.select %7, %0, %8 : vector<8x32xi1>, vector<8x32xf32>
    %cst_4 = arith.constant dense<0.000000e+00> : vector<8xf32>
    %10 = vector.multi_reduction <add>, %9, %cst_4 [1] : vector<8x32xf32> to vector<8xf32>
    %11 = vector.shape_cast %10 : vector<8xf32> to vector<8x1xf32>
    %12 = vector.broadcast %2 : vector<8x1xf32> to vector<8x32xf32>
    %13 = arith.subf %0, %12 : vector<8x32xf32>
    %14 = math.exp %13 : vector<8x32xf32>
    %cst_5 = arith.constant dense<0.000000e+00> : vector<8xf32>
    %15 = vector.multi_reduction <add>, %14, %cst_5 [1] : vector<8x32xf32> to vector<8xf32>
    %16 = vector.shape_cast %15 : vector<8xf32> to vector<8x1xf32>
    %17 = math.log %16 : vector<8x1xf32>
    %18 = arith.subf %11, %2 : vector<8x1xf32>
    %19 = arith.subf %17, %18 : vector<8x1xf32>
    %20 = vector.shape_cast %19 : vector<8x1xf32> to vector<1x8x1xf32>
    %cst_6 = arith.constant dense<0.000000e+00> : vector<1xf32>
    %21 = vector.multi_reduction <add>, %20, %cst_6 [1, 2] : vector<1x8x1xf32> to vector<1xf32>
    %22 = vector.shape_cast %21 : vector<1xf32> to vector<1x1x1xf32>
    %23 = vector.extract %22[0, 0, 0] : f32 from vector<1x1x1xf32>
    %24 = tpu.iota {dimensions = array<i32: 0>} : vector<8x128xi32>
    %25 = tpu.iota {dimensions = array<i32: 1>} : vector<8x128xi32>
    %c0_i32 = arith.constant 0 : i32
    %26 = vector.broadcast %c0_i32 : i32 to vector<8x128xi32>
    %27 = arith.cmpi eq, %24, %26 : vector<8x128xi32>
    %c0_i32_7 = arith.constant 0 : i32
    %28 = vector.broadcast %c0_i32_7 : i32 to vector<8x128xi32>
    %29 = arith.cmpi eq, %25, %28 : vector<8x128xi32>
    %30 = arith.andi %27, %29 : vector<8x128xi1>
    %cst_8 = arith.constant 0.000000e+00 : f32
    %31 = vector.broadcast %23 : f32 to vector<8x128xf32>
    %32 = vector.broadcast %cst_8 : f32 to vector<8x128xf32>
    %33 = arith.select %30, %31, %32 : vector<8x128xi1>, vector<8x128xf32>
    %c0_9 = arith.constant 0 : index
    %c0_10 = arith.constant 0 : index
    %34 = vector.load %arg3[%c0_9, %c0_10] : memref<8x128xf32, #tpu.memory_space<vmem>>, vector<8x128xf32>
    tpu.vector_store %arg3[%c0_9, %c0_10], %33 {strides = array<i32>} : memref<8x128xf32, #tpu.memory_space<vmem>>, vector<8x128xf32>,
    return
  }
  func.func @transform_0(%arg0: i32) -> (i32, i32) {
    %c0_i32 = arith.constant 0 : i32
    %c0_i32_0 = arith.constant 0 : i32
    return %arg0, %c0_i32 : i32, i32
  }
  func.func @transform_1(%arg0: i32) -> (i32, i32) {
    %c0_i32 = arith.constant 0 : i32
    %c0_i32_0 = arith.constant 0 : i32
    return %arg0, %c0_i32 : i32, i32
  }
  func.func @transform_2(%arg0: i32) -> (i32, i32) {
    %c0_i32 = arith.constant 0 : i32
    %c0_i32_0 = arith.constant 0 : i32
    return %arg0, %c0_i32 : i32, i32
  }
}

</mosaic_0001>

<llo_original>
// kernel: tpu_custom_call.1
$region0: #{tpu_custom_call.1}
  #allocation0 [shape = 'u32[]', space=smem, size = 0x4, offset = 0x4, fixed_abs, tag = 'smem constant byte address 0x4 - core index']
  #allocation1 [shape = 'u32[144,128]{1,0:T(1,128)}', space=vmem, size = 0x12000, scoped, tag = 'internal scratch']
  %s0 = inlined_call_operand.vmem [shape: f32[8,32], index: 0, kind: input, shape index: {}]
  %s1 = inlined_call_operand.vmem [shape: s32[8,1], index: 1, kind: input, shape index: {}]
  %s2 = inlined_call_operand.hbm [shape: f32[8,128], index: 2, kind: output, shape index: {}]
  %s3 = sld [smem:[#allocation0]]
  $region18: #{tpu_custom_call.1} parent=0
    _
  %s5 = ssub.s32 1, %s3
  %s6 = scalar_select 0, %s5, %s3
  $region1: #{tpu_custom_call.1} parent=0
    #allocation2 [shape = 'u8[4096]{0}', space=vmem, size = 0x1000, scoped, tag = 'output window, operand 0, single buffered']
    #allocation3 [shape = 's32[1]{0}', space=sflag, size = 0x4, scoped, tag = 'scoped memory for tpu_custom_call.1']
    %7 = vsyncpa [#allocation3], 0
    // Predicated region
    $region2: #{tpu_custom_call.1} parent=1 // pred_check
      _
    $region3: #{tpu_custom_call.1} parent=1 // pred_check_branch
      %9 = sbr.rel (0) target = $region5
    $region4: #{tpu_custom_call.1} parent=1 // pred_region
      _
    $region5: #{tpu_custom_call.1} parent=1 // pred_fallthru
      _
    // Predicated region
    $region6: #{tpu_custom_call.1} parent=1 // pred_check
      _
    $region7: #{tpu_custom_call.1} parent=1 // pred_check_branch
      %11 = sbr.rel (0) target = $region9
    $region8: #{tpu_custom_call.1} parent=1 // pred_region
      _
    $region9: #{tpu_custom_call.1} parent=1 // pred_fallthru
      _
    %v12 = vld [vmem:[%s0] sm:$0xff]
    %vm13 = vcmask 261120
    %v14 = vsel %vm13, %v12, -inf
    %15 = vmax.xlane.f32.xlu0 %v14
    %v16 = vpop.xlane.xlu0 %15
    %v17 = vld [vmem:[%s1] sm:$0xff]
    %v18 = vlaneseq
    %v19 = vand.u32 %v18, 127
    %20 = vset.pattern.permute.xlu0 0
    %21 = vperm.xlu0 %20, %v17
    %v22 = vpop.permute.xlu0 %21
    %vm23 = vcmp.eq.s32.totalorder %v19, %v22
    %v24 = vsel %vm23, %v12, 0.0
    %v25 = vsel %vm13, %v24, 0.0
    %26 = vadd.xlane.f32.xlu0 %v25
    %v27 = vpop.xlane.xlu0 %26
    %v28 = vsub.f32 %v12, %v16
    %v29 = vmul.f32 %v28, 1.442695
    %v30 = vpow.pop %v29
    %v31 = vsel %vm13, %v30, 0.0
    %32 = vadd.xlane.f32.xlu0 %v31
    %v33 = vpop.xlane.xlu0 %32
    %v34 = vlog2.pop %v33
    %v35 = vmul.f32 %v34, 0.6931472
    %v36 = vsub.f32 %v27, %v16
    %v37 = vsub.f32 %v35, %v36
    %vm38 = vcmask 7168
    %v39 = vsel %vm38, %v37, 0.0
    %40 = vadd.xlane.f32.xlu0 %v39
    %v41 = vpop.xlane.xlu0 %40
    %v42 = vrot.slane %v41, 4
    %v43 = vadd.f32 %v41, %v42
    %v44 = vrot.slane %v43, 2
    %v45 = vadd.f32 %v43, %v44
    %v46 = vrot.slane %v45, 1
    %v47 = vadd.f32 %v45, %v46
    %s48 = vtos %v47
    %v49 = vlaneseq
    %v50 = vshrl.u32 %v49, 7
    %vm51 = vcmp.eq.s32.totalorder %v50, 0
    %vm52 = vcmp.eq.s32.totalorder %v19, 0
    %vm53 = vmand %vm51, %vm52
    %v54 = vstv %s48
    %v55 = vsel %vm53, %v54, 0.0
    %56 = vst [vmem:[#allocation2] sm:$0xff] %v55
    // Predicated region
    $region10: #{tpu_custom_call.1} parent=1 // pred_check
      _
    $region11: #{tpu_custom_call.1} parent=1 // pred_check_branch
      %58 = sbr.rel (0) target = $region13
    $region12: #{tpu_custom_call.1} parent=1 // pred_region
      %s60 = ssub.s32 128, 128
      %61 = vsyncadd [#allocation3], %s60
      %s63 = sshll.u32 [#allocation2], 4
      %s64 = int_to_ptr.vmem [resolvable:$true] %s63
      %66 = dma.vmem_to_hbm [thread:$0]  %s64, 128, %s2, [#allocation3]
    $region13: #{tpu_custom_call.1} parent=1 // pred_fallthru
      _
    // Predicated region
    $region14: #{tpu_custom_call.1} parent=1 // pred_check
      _
    $region15: #{tpu_custom_call.1} parent=1 // pred_check_branch
      %68 = sbr.rel (0) target = $region17
    $region16: #{tpu_custom_call.1} parent=1 // pred_region
      %69 = dma.done [#allocation3], 128
    $region17: #{tpu_custom_call.1} parent=1 // pred_fallthru
      _
    %70 = vsyncpa [#allocation3], 1

</llo_original>
